<compile_context>
chip_gen: v7x
topology: tpu7x:2x2x1
jax: 0.10.0
libtpu: 0.0.40
codegen_flags: <defaults>
</compile_context>

<pallas_src>
import jax
import jax.numpy as jnp
from jax.experimental import pallas as pl
from jax.experimental.pallas import tpu as pltpu


_NEG_INF = -1e30                          # column mask for padded vocab lanes
_VMEM_LIMIT_BYTES = 48 * 1024 * 1024      # > 16/32 MiB defaults, < v7x 64 MiB


def _round_up(x, m):
    return -(-x // m) * m


def _log_softmax_f32(logits):
    m = jnp.max(logits, axis=-1, keepdims=True)
    z = logits - m
    lse = jnp.log(jnp.sum(jnp.exp(z), axis=-1, keepdims=True))
    return z - lse


# --------------------------------------------------------------------------
# Kernel bodies
# --------------------------------------------------------------------------
def _mm_logsoftmax_kernel(x_ref, w_ref, b_ref, out_ref):
    # x_ref: (tm, H) bf16 tile, w_ref: (H, Vp) bf16 resident, b_ref: (1, Vp) f32
    logits = jnp.dot(x_ref[...], w_ref[...],
                     preferred_element_type=jnp.float32) + b_ref[...]
    out_ref[...] = _log_softmax_f32(logits).astype(out_ref.dtype)


def _mm_logsoftmax_scale_kernel(x_ref, w_ref, b_ref, scale_ref, out_ref):
    logits = jnp.dot(x_ref[...], w_ref[...],
                     preferred_element_type=jnp.float32) + b_ref[...]
    logp = _log_softmax_f32(logits)
    out_ref[...] = (scale_ref[...].astype(jnp.float32) * logp).astype(out_ref.dtype)


# --------------------------------------------------------------------------
# Wrapper: out = [scale *] log_softmax(x @ w [+ bias], axis=-1)
# --------------------------------------------------------------------------
def mm_logsoftmax(x, w, *, bias=None, scale=None, tm=256, out_dtype=jnp.float32):
    """x: [M, H], w: [H, V], bias: [V] or None, scale: [M, V] or None -> [M, V]."""
    M, H = x.shape
    V = w.shape[1]

    # Lane-dense vocab (multiple of 128) and bf16-friendly row tiles (mult of 16).
    Vp = _round_up(V, 128)
    tm = max(16, _round_up(tm, 16))
    tm_eff = min(tm, _round_up(M, 16))
    Mp = _round_up(M, tm_eff)

    # bf16 MXU inputs; accumulation + softmax math stay f32 inside the kernel.
    xb = x.astype(jnp.bfloat16)
    if Mp != M:
        xb = jnp.pad(xb, ((0, Mp - M), (0, 0)))
    wb = w.astype(jnp.bfloat16)
    if Vp != V:
        wb = jnp.pad(wb, ((0, 0), (0, Vp - V)))

    # Bias row doubles as the vocab-padding mask: padded lanes get -1e30 so they
    # never affect the row max / log-sum-exp.
    col_bias = jnp.full((Vp,), _NEG_INF, dtype=jnp.float32)
    if bias is not None:
        col_bias = col_bias.at[:V].set(bias.astype(jnp.float32))
    else:
        col_bias = col_bias.at[:V].set(0.0)
    col_bias = col_bias.reshape(1, Vp)

    # Weight + bias: whole-array resident in VMEM (single copy for the entire
    # grid — no double-buffered weight, no repeated weight DMA).
    in_specs = [
        pl.BlockSpec((tm_eff, H), lambda i: (i, 0)),
        pl.BlockSpec(memory_space=pltpu.MemorySpace.VMEM),   # weight
        pl.BlockSpec(memory_space=pltpu.MemorySpace.VMEM),   # bias / pad mask
    ]
    args = [xb, wb, col_bias]

    if scale is None:
        kernel = _mm_logsoftmax_kernel
    else:
        sb = scale.astype(jnp.bfloat16)
        sb = jnp.pad(sb, ((0, Mp - M), (0, Vp - V)))
        in_specs.append(pl.BlockSpec((tm_eff, Vp), lambda i: (i, 0)))
        args.append(sb)
        kernel = _mm_logsoftmax_scale_kernel

    out = pl.pallas_call(
        kernel,
        out_shape=jax.ShapeDtypeStruct((Mp, Vp), out_dtype),
        grid_spec=pltpu.PrefetchScalarGridSpec(
            num_scalar_prefetch=0,
            grid=(Mp // tm_eff,),
            in_specs=in_specs,
            out_specs=pl.BlockSpec((tm_eff, Vp), lambda i: (i, 0)),
        ),
        compiler_params=pltpu.CompilerParams(
            dimension_semantics=("parallel",),     # v7x: shard rows across 2 TCs
            vmem_limit_bytes=_VMEM_LIMIT_BYTES,
        ),
    )(*args)
    return out[:M, :V]


# --------------------------------------------------------------------------
# SDCEM forward (JAX glue around the Pallas hot paths)
# --------------------------------------------------------------------------
def sdcem_forward(params, data_seqs, s_ids, d_ids, len_list, *, tm=256):
    """
    Returns (mask_lm_out [B,S,V], p_sd [B,S,V]) like SDCEM.forward.
    d_ids / len_list are accepted for signature parity (d_ids is unused by the
    reference forward; len_list only feeds the backbone model).
    """
    token_emb = params["token_emb"]      # [V, H]
    w_lm = params["w_lm"]                # [H, V]  (nn.Linear weight, transposed)
    b_lm = params["b_lm"]                # [V]
    mob = params["mob"]                  # [V, V]  frozen mobility embedding

    B, S = data_seqs.shape
    V, H = token_emb.shape
    M = B * S

    # --- backbone: self.model(data_seqs, len_list) ---
    # TODO(synk): the backbone `Model` is not defined in the source; stand in
    # with its token-embedding lookup producing x: [B, S, H].
    x = jnp.take(token_emb, data_seqs, axis=0)              # [B, S, H]

    # --- embedding lookups (glue) ---
    s_embeddings = jnp.take(token_emb, s_ids, axis=0)        # [B, S, H]
    # all_embeddings = token(category_ids [V,1]) -> [V,1,H]; squeeze(-2).T -> [H,V]
    all_emb_t = token_emb.T                                   # [H, V]
    s2d_mob = jnp.take(mob, s_ids, axis=0)                    # [B, S, V]
    # TODO(synk): for very large V, gather mob rows in-kernel via scalar-prefetched
    # s_ids instead of materializing the [B,S,V] gather in HBM.

    # --- hot path 1: MaskedCategoryModel: log_softmax(linear(x)) ---
    mask_lm_out = mm_logsoftmax(
        x.reshape(M, H), w_lm, bias=b_lm, scale=None, tm=tm).reshape(B, S, V)

    # --- hot path 2: NextTransitionPrediction: mob * log_softmax(s_emb @ E^T) ---
    p_sd = mm_logsoftmax(
        s_embeddings.reshape(M, H), all_emb_t, bias=None,
        scale=s2d_mob.reshape(M, V), tm=tm).reshape(B, S, V)

    return mask_lm_out, p_sd


# --------------------------------------------------------------------------
# Pure-JAX (f32) reference for sanity checking
# --------------------------------------------------------------------------
def sdcem_reference(params, data_seqs, s_ids, d_ids, len_list):
    token_emb, w_lm, b_lm, mob = (params["token_emb"], params["w_lm"],
                                  params["b_lm"], params["mob"])
    x = jnp.take(token_emb, data_seqs, axis=0)
    out1 = jax.nn.log_softmax(x @ w_lm + b_lm, axis=-1)
    s_emb = jnp.take(token_emb, s_ids, axis=0)
    out2 = jnp.take(mob, s_ids, axis=0) * jax.nn.log_softmax(s_emb @ token_emb.T,
                                                             axis=-1)
    return out1, out2


if __name__ == "__main__":
    # Small shapes: batch=2, seq=8, hidden=32, vocab=16
    B, S, H, V = 2, 8, 32, 16

    key = jax.random.PRNGKey(0)
    k_emb, k_w, k_b, k_mob, k_seq, k_sid, k_did = jax.random.split(key, 7)

    params = {
        "token_emb": jax.random.normal(k_emb, (V, H), jnp.float32) * 0.1,
        "w_lm":      jax.random.normal(k_w, (H, V), jnp.float32) * 0.1,
        "b_lm":      jax.random.normal(k_b, (V,), jnp.float32) * 0.1,
        "mob":       jax.random.uniform(k_mob, (V, V), jnp.float32),
    }

    data_seqs = jax.random.randint(k_seq, (B, S), 0, V)
    s_ids     = jax.random.randint(k_sid, (B, S), 0, V)
    d_ids     = jax.random.randint(k_did, (B, S), 0, V)   # unused by forward
    len_list  = jnp.full((B,), S, jnp.int32)

    fwd = jax.jit(sdcem_forward)
    out_lm, out_sd = fwd(params, data_seqs, s_ids, d_ids, len_list)
    jax.block_until_ready((out_lm, out_sd))

    ref_lm, ref_sd = sdcem_reference(params, data_seqs, s_ids, d_ids, len_list)
    assert out_lm.shape == (B, S, V) and out_sd.shape == (B, S, V)
    # bf16 MXU inputs (f32 accumulate / softmax) -> relaxed tolerance vs f32 ref.
    assert jnp.allclose(out_lm, ref_lm, atol=2e-2, rtol=2e-2)
    assert jnp.allclose(out_sd, ref_sd, atol=2e-2, rtol=2e-2)

    print("KERNEL_OK")
</pallas_src>

<mosaic_0001>
module attributes {stable_mosaic.version = 11 : i64} {
  func.func @_mm_logsoftmax_kernel(%arg0: i32, %arg1: memref<16x32xbf16, #tpu.memory_space<vmem>>, %arg2: memref<32x128xbf16, #tpu.memory_space<vmem>>, %arg3: memref<1x128xf32, #tpu.memory_space<vmem>>, %arg4: memref<16x128xf32, #tpu.memory_space<vmem>>) attributes {dimension_semantics = [#tpu.dimension_semantics<parallel>], iteration_bounds = array<i64: 1>, scalar_prefetch = 0 : i64, scratch_operands = 0 : i64, tpu.core_type = #tpu.core_type<tc>, window_params = [{transform_indices = @transform_0, window_bounds = array<i64: 16, 32>}, {pipeline_mode = #tpu.pipeline_mode<synchronous>, transform_indices = @transform_1, window_bounds = array<i64: 32, 128>}, {pipeline_mode = #tpu.pipeline_mode<synchronous>, transform_indices = @transform_2, window_bounds = array<i64: 1, 128>}, {transform_indices = @transform_3, window_bounds = array<i64: 16, 128>}]} {
    %c0 = arith.constant 0 : index
    %c0_0 = arith.constant 0 : index
    %0 = vector.load %arg1[%c0, %c0_0] : memref<16x32xbf16, #tpu.memory_space<vmem>>, vector<16x32xbf16>
    %c0_1 = arith.constant 0 : index
    %c0_2 = arith.constant 0 : index
    %1 = vector.load %arg2[%c0_1, %c0_2] : memref<32x128xbf16, #tpu.memory_space<vmem>>, vector<32x128xbf16>
    %cst = arith.constant dense<0.000000e+00> : vector<16x128xf32>
    %2 = tpu.matmul %0, %1, %cst {dimension_numbers = #tpu.dot_dimension_numbers<[1], [0], [0], [1], [0, 0, 1, 1], [], []>} : vector<16x32xbf16>, vector<32x128xbf16>, vector<16x128xf32> -> vector<16x128xf32>
    %c0_3 = arith.constant 0 : index
    %c0_4 = arith.constant 0 : index
    %3 = vector.load %arg3[%c0_3, %c0_4] : memref<1x128xf32, #tpu.memory_space<vmem>>, vector<1x128xf32>
    %4 = vector.broadcast %3 : vector<1x128xf32> to vector<16x128xf32>
    %5 = arith.addf %2, %4 : vector<16x128xf32>
    %cst_5 = arith.constant dense<0xFF800000> : vector<16xf32>
    %6 = vector.multi_reduction <maximumf>, %5, %cst_5 [1] : vector<16x128xf32> to vector<16xf32>
    %7 = vector.shape_cast %6 : vector<16xf32> to vector<16x1xf32>
    %8 = vector.broadcast %7 : vector<16x1xf32> to vector<16x128xf32>
    %9 = arith.subf %5, %8 : vector<16x128xf32>
    %10 = math.exp %9 : vector<16x128xf32>
    %cst_6 = arith.constant dense<0.000000e+00> : vector<16xf32>
    %11 = vector.multi_reduction <add>, %10, %cst_6 [1] : vector<16x128xf32> to vector<16xf32>
    %12 = vector.shape_cast %11 : vector<16xf32> to vector<16x1xf32>
    %13 = math.log %12 : vector<16x1xf32>
    %14 = vector.broadcast %13 : vector<16x1xf32> to vector<16x128xf32>
    %15 = arith.subf %9, %14 : vector<16x128xf32>
    %c0_7 = arith.constant 0 : index
    %c0_8 = arith.constant 0 : index
    %16 = vector.load %arg4[%c0_7, %c0_8] : memref<16x128xf32, #tpu.memory_space<vmem>>, vector<16x128xf32>
    tpu.vector_store %arg4[%c0_7, %c0_8], %15 {strides = array<i32>} : memref<16x128xf32, #tpu.memory_space<vmem>>, vector<16x128xf32>,
    return
  }
  func.func @transform_0(%arg0: i32) -> (i32, i32) {
    %c0_i32 = arith.constant 0 : i32
    %c0_i32_0 = arith.constant 0 : i32
    return %arg0, %c0_i32 : i32, i32
  }
  func.func @transform_1(%arg0: i32) -> (i32, i32) {
    %c0_i32 = arith.constant 0 : i32
    %c0_i32_0 = arith.constant 0 : i32
    %c0_i32_1 = arith.constant 0 : i32
    return %c0_i32, %c0_i32_0 : i32, i32
  }
  func.func @transform_2(%arg0: i32) -> (i32, i32) {
    %c0_i32 = arith.constant 0 : i32
    %c0_i32_0 = arith.constant 0 : i32
    %c0_i32_1 = arith.constant 0 : i32
    return %c0_i32, %c0_i32_0 : i32, i32
  }
  func.func @transform_3(%arg0: i32) -> (i32, i32) {
    %c0_i32 = arith.constant 0 : i32
    %c0_i32_0 = arith.constant 0 : i32
    return %arg0, %c0_i32 : i32, i32
  }
}

module attributes {stable_mosaic.version = 11 : i64} {
  func.func @_mm_logsoftmax_scale_kernel(%arg0: i32, %arg1: memref<16x32xbf16, #tpu.memory_space<vmem>>, %arg2: memref<32x128xbf16, #tpu.memory_space<vmem>>, %arg3: memref<1x128xf32, #tpu.memory_space<vmem>>, %arg4: memref<16x128xbf16, #tpu.memory_space<vmem>>, %arg5: memref<16x128xf32, #tpu.memory_space<vmem>>) attributes {dimension_semantics = [#tpu.dimension_semantics<parallel>], iteration_bounds = array<i64: 1>, scalar_prefetch = 0 : i64, scratch_operands = 0 : i64, tpu.core_type = #tpu.core_type<tc>, window_params = [{transform_indices = @transform_0, window_bounds = array<i64: 16, 32>}, {pipeline_mode = #tpu.pipeline_mode<synchronous>, transform_indices = @transform_1, window_bounds = array<i64: 32, 128>}, {pipeline_mode = #tpu.pipeline_mode<synchronous>, transform_indices = @transform_2, window_bounds = array<i64: 1, 128>}, {transform_indices = @transform_3, window_bounds = array<i64: 16, 128>}, {transform_indices = @transform_4, window_bounds = array<i64: 16, 128>}]} {
    %c0 = arith.constant 0 : index
    %c0_0 = arith.constant 0 : index
    %0 = vector.load %arg1[%c0, %c0_0] : memref<16x32xbf16, #tpu.memory_space<vmem>>, vector<16x32xbf16>
    %c0_1 = arith.constant 0 : index
    %c0_2 = arith.constant 0 : index
    %1 = vector.load %arg2[%c0_1, %c0_2] : memref<32x128xbf16, #tpu.memory_space<vmem>>, vector<32x128xbf16>
    %cst = arith.constant dense<0.000000e+00> : vector<16x128xf32>
    %2 = tpu.matmul %0, %1, %cst {dimension_numbers = #tpu.dot_dimension_numbers<[1], [0], [0], [1], [0, 0, 1, 1], [], []>} : vector<16x32xbf16>, vector<32x128xbf16>, vector<16x128xf32> -> vector<16x128xf32>
    %c0_3 = arith.constant 0 : index
    %c0_4 = arith.constant 0 : index
    %3 = vector.load %arg3[%c0_3, %c0_4] : memref<1x128xf32, #tpu.memory_space<vmem>>, vector<1x128xf32>
    %4 = vector.broadcast %3 : vector<1x128xf32> to vector<16x128xf32>
    %5 = arith.addf %2, %4 : vector<16x128xf32>
    %cst_5 = arith.constant dense<0xFF800000> : vector<16xf32>
    %6 = vector.multi_reduction <maximumf>, %5, %cst_5 [1] : vector<16x128xf32> to vector<16xf32>
    %7 = vector.shape_cast %6 : vector<16xf32> to vector<16x1xf32>
    %8 = vector.broadcast %7 : vector<16x1xf32> to vector<16x128xf32>
    %9 = arith.subf %5, %8 : vector<16x128xf32>
    %10 = math.exp %9 : vector<16x128xf32>
    %cst_6 = arith.constant dense<0.000000e+00> : vector<16xf32>
    %11 = vector.multi_reduction <add>, %10, %cst_6 [1] : vector<16x128xf32> to vector<16xf32>
    %12 = vector.shape_cast %11 : vector<16xf32> to vector<16x1xf32>
    %13 = math.log %12 : vector<16x1xf32>
    %14 = vector.broadcast %13 : vector<16x1xf32> to vector<16x128xf32>
    %15 = arith.subf %9, %14 : vector<16x128xf32>
    %c0_7 = arith.constant 0 : index
    %c0_8 = arith.constant 0 : index
    %16 = vector.load %arg4[%c0_7, %c0_8] : memref<16x128xbf16, #tpu.memory_space<vmem>>, vector<16x128xbf16>
    %17 = arith.extf %16 : vector<16x128xbf16> to vector<16x128xf32>
    %18 = arith.mulf %17, %15 : vector<16x128xf32>
    %c0_9 = arith.constant 0 : index
    %c0_10 = arith.constant 0 : index
    %19 = vector.load %arg5[%c0_9, %c0_10] : memref<16x128xf32, #tpu.memory_space<vmem>>, vector<16x128xf32>
    tpu.vector_store %arg5[%c0_9, %c0_10], %18 {strides = array<i32>} : memref<16x128xf32, #tpu.memory_space<vmem>>, vector<16x128xf32>,
    return
  }
  func.func @transform_0(%arg0: i32) -> (i32, i32) {
    %c0_i32 = arith.constant 0 : i32
    %c0_i32_0 = arith.constant 0 : i32
    return %arg0, %c0_i32 : i32, i32
  }
  func.func @transform_1(%arg0: i32) -> (i32, i32) {
    %c0_i32 = arith.constant 0 : i32
    %c0_i32_0 = arith.constant 0 : i32
    %c0_i32_1 = arith.constant 0 : i32
    return %c0_i32, %c0_i32_0 : i32, i32
  }
  func.func @transform_2(%arg0: i32) -> (i32, i32) {
    %c0_i32 = arith.constant 0 : i32
    %c0_i32_0 = arith.constant 0 : i32
    %c0_i32_1 = arith.constant 0 : i32
    return %c0_i32, %c0_i32_0 : i32, i32
  }
  func.func @transform_3(%arg0: i32) -> (i32, i32) {
    %c0_i32 = arith.constant 0 : i32
    %c0_i32_0 = arith.constant 0 : i32
    return %arg0, %c0_i32 : i32, i32
  }
  func.func @transform_4(%arg0: i32) -> (i32, i32) {
    %c0_i32 = arith.constant 0 : i32
    %c0_i32_0 = arith.constant 0 : i32
    return %arg0, %c0_i32 : i32, i32
  }
}

</mosaic_0001>

<llo_original>
// kernel: sdcem_forward.2
$region0: #{sdcem_forward.2}
  #allocation0 [shape = 'u32[]', space=smem, size = 0x4, offset = 0x4, fixed_abs, tag = 'smem constant byte address 0x4 - core index']
  #allocation1 [shape = 'u32[144,128]{1,0:T(1,128)}', space=vmem, size = 0x12000, scoped, tag = 'internal scratch']
  %s0 = inlined_call_operand.vmem [shape: bf16[16,32], index: 0, kind: input, shape index: {}]
  %s1 = inlined_call_operand.vmem [shape: bf16[32,128], index: 1, kind: input, shape index: {}]
  %s2 = inlined_call_operand.vmem [shape: f32[1,128], index: 2, kind: input, shape index: {}]
  %s3 = inlined_call_operand.vmem [shape: f32[16,128], index: 3, kind: output, shape index: {}]
  %s4 = sld [smem:[#allocation0]]
  $region22: #{sdcem_forward.2} parent=0
    _
  %s6 = ssub.s32 1, %s4
  %s7 = scalar_select 0, %s6, %s4
  // Predicated region
  $region2: #{sdcem_forward.2} parent=0 // pred_check
    _
  $region3: #{sdcem_forward.2} parent=0 // pred_check_branch
    %9 = sbr.rel (0) target = $region5
  $region4: #{sdcem_forward.2} parent=0 // pred_region
    _
  $region5: #{sdcem_forward.2} parent=0 // pred_fallthru
    _
  // Predicated region
  $region6: #{sdcem_forward.2} parent=0 // pred_check
    _
  $region7: #{sdcem_forward.2} parent=0 // pred_check_branch
    %11 = sbr.rel (0) target = $region9
  $region8: #{sdcem_forward.2} parent=0 // pred_region
    _
  $region9: #{sdcem_forward.2} parent=0 // pred_fallthru
    _
  // Predicated region
  $region10: #{sdcem_forward.2} parent=0 // pred_check
    _
  $region11: #{sdcem_forward.2} parent=0 // pred_check_branch
    %13 = sbr.rel (0) target = $region13
  $region12: #{sdcem_forward.2} parent=0 // pred_region
    _
  $region13: #{sdcem_forward.2} parent=0 // pred_fallthru
    _
  %v15 = vld [vmem:[%s0] sm:$0xf]
  %v16 = vld [vmem:[%s0 + $0x4] sm:$0xf]
  %v17 = vld [vmem:[%s1] sm:$0xf]
  %v18 = vld [vmem:[%s1 + $0x4] sm:$0xf]
  %v19 = vld [vmem:[%s1 + $0x8] sm:$0xf]
  %v20 = vld [vmem:[%s1 + $0xc] sm:$0xf]
  %v21 = vld [vmem:[%s2] sm:$0x1]
  %v23 = vlaneseq
  %v24 = vshrl.u32 %v23, 7
  %v25 = vsub.s32 0, %v24
  %v26 = vrot.slane %v21, %v25
  %v30 = vunpack.c.l.b16 %v15
  %v31 = vunpack.c.l.b16 %v16
  %v32 = vpack.c.b16 %v31, %v30
  %v37 = vunpack.c.l.b16 %v17
  %v38 = vunpack.c.l.b16 %v18
  %v39 = vunpack.c.l.b16 %v19
  %v40 = vunpack.c.l.b16 %v20
  %v41 = vpack.c.b16 %v38, %v37
  %v42 = vpack.c.b16 %v40, %v39
  %vm45 = vcmask 261120
  %v47 = vsel %vm45, %v32, 0
  %49 = vmatprep.subr.bf16.mxu0 0
  %50 = vmatpush1.bf16.msra.mxu0 %v41
  %51 = vmatprep.subr.bf16.mxu0 0
  %52 = vmatpush1.bf16.msra.mxu0 %v42
  %53 = vmatprep.subr.bf16.mxu0 0
  %54 = vmatpush1.bf16.msra.mxu0 0
  %55 = vmatprep.subr.bf16.mxu0 0
  %56 = vmatpush1.bf16.msra.mxu0 0
  %57 = vmatprep.subr.bf16.mxu0 0
  %58 = vmatpush1.bf16.msra.mxu0 0
  %59 = vmatprep.subr.bf16.mxu0 0
  %60 = vmatpush1.bf16.msra.mxu0 0
  %61 = vmatprep.subr.bf16.mxu0 0
  %62 = vmatpush1.bf16.msra.mxu0 0
  %63 = vmatprep.subr.bf16.mxu0 0
  %64 = vmatpush1.bf16.msra.mxu0 0
  %65 = vmatprep.subr.bf16.mxu0 0
  %66 = vmatpush1.bf16.msra.mxu0 0
  %67 = vmatprep.subr.bf16.mxu0 0
  %68 = vmatpush1.bf16.msra.mxu0 0
  %69 = vmatprep.subr.bf16.mxu0 0
  %70 = vmatpush1.bf16.msra.mxu0 0
  %71 = vmatprep.subr.bf16.mxu0 0
  %72 = vmatpush1.bf16.msra.mxu0 0
  %73 = vmatprep.subr.bf16.mxu0 0
  %74 = vmatpush1.bf16.msra.mxu0 0
  %75 = vmatprep.subr.bf16.mxu0 0
  %76 = vmatpush1.bf16.msra.mxu0 0
  %77 = vmatprep.subr.bf16.mxu0 0
  %78 = vmatpush1.bf16.msra.mxu0 0
  %79 = vmatprep.subr.bf16.mxu0 0
  %80 = vmatpush1.bf16.msra.mxu0 0
  %81 = vmatprep.mubr.bf16.mxu0 0
  %82 = vmatmul.mubr.bf16.gmra.mrb[0].mxu0 %v47
  %v83 = vpop.f32.mrb[0].mxu0
  %v84 = vadd.f32 %v26, %v83
  %v85 = vpop.f32.mrb[0].mxu0
  %v86 = vpop.f32.mrb[0].mxu0
  %v87 = vadd.f32 %v26, %v86
  %v88 = vpop.f32.mrb[0].mxu0
  %89 = vdwg.mxu0
  %90 = vmax.xlane.f32.xlu0 %v84
  %v91 = vpop.xlane.xlu0 %90
  %92 = vmax.xlane.f32.xlu0 %v87
  %v93 = vpop.xlane.xlu0 %92
  %v94 = vsub.f32 %v84, %v91
  %v95 = vsub.f32 %v87, %v93
  %v96 = vmul.f32 %v94, 1.442695
  %v97 = vpow.pop %v96
  %v98 = vmul.f32 %v95, 1.442695
  %v99 = vpow.pop %v98
  %100 = vadd.xlane.f32.xlu0 %v97
  %v101 = vpop.xlane.xlu0 %100
  %102 = vadd.xlane.f32.xlu0 %v99
  %v103 = vpop.xlane.xlu0 %102
  %v104 = vlog2.pop %v101
  %v105 = vmul.f32 %v104, 0.6931472
  %v106 = vlog2.pop %v103
  %v107 = vmul.f32 %v106, 0.6931472
  %v108 = vsub.f32 %v94, %v105
  %v109 = vsub.f32 %v95, %v107
  %110 = vst [vmem:[%s3] sm:$0xff] %v108
  %111 = vst [vmem:[%s3 + $0x8] sm:$0xff] %v109
  // Predicated region
  $region14: #{sdcem_forward.2} parent=0 // pred_check
    _
  $region15: #{sdcem_forward.2} parent=0 // pred_check_branch
    %113 = sbr.rel (0) target = $region17
  $region16: #{sdcem_forward.2} parent=0 // pred_region
    _
  $region17: #{sdcem_forward.2} parent=0 // pred_fallthru
    _
  // Predicated region
  $region18: #{sdcem_forward.2} parent=0 // pred_check
    _
  $region19: #{sdcem_forward.2} parent=0 // pred_check_branch
    %115 = sbr.rel (0) target = $region21
  $region20: #{sdcem_forward.2} parent=0 // pred_region
    _
  $region21: #{sdcem_forward.2} parent=0 // pred_fallthru
    _

// kernel: sdcem_forward.3
$region0: #{sdcem_forward.3}
  #allocation0 [shape = 'u32[]', space=smem, size = 0x4, offset = 0x4, fixed_abs, tag = 'smem constant byte address 0x4 - core index']
  #allocation1 [shape = 'u32[144,128]{1,0:T(1,128)}', space=vmem, size = 0x12000, scoped, tag = 'internal scratch']
  %s0 = inlined_call_operand.vmem [shape: bf16[16,32], index: 0, kind: input, shape index: {}]
  %s1 = inlined_call_operand.vmem [shape: bf16[32,128], index: 1, kind: input, shape index: {}]
  %s2 = inlined_call_operand.vmem [shape: f32[1,128], index: 2, kind: input, shape index: {}]
  %s3 = inlined_call_operand.vmem [shape: bf16[16,128], index: 3, kind: input, shape index: {}]
  %s4 = inlined_call_operand.vmem [shape: f32[16,128], index: 4, kind: output, shape index: {}]
  %s5 = sld [smem:[#allocation0]]
  $region26: #{sdcem_forward.3} parent=0
    _
  %s7 = ssub.s32 1, %s5
  %s8 = scalar_select 0, %s7, %s5
  // Predicated region
  $region2: #{sdcem_forward.3} parent=0 // pred_check
    _
  $region3: #{sdcem_forward.3} parent=0 // pred_check_branch
    %10 = sbr.rel (0) target = $region5
  $region4: #{sdcem_forward.3} parent=0 // pred_region
    _
  $region5: #{sdcem_forward.3} parent=0 // pred_fallthru
    _
  // Predicated region
  $region6: #{sdcem_forward.3} parent=0 // pred_check
    _
  $region7: #{sdcem_forward.3} parent=0 // pred_check_branch
    %12 = sbr.rel (0) target = $region9
  $region8: #{sdcem_forward.3} parent=0 // pred_region
    _
  $region9: #{sdcem_forward.3} parent=0 // pred_fallthru
    _
  // Predicated region
  $region10: #{sdcem_forward.3} parent=0 // pred_check
    _
  $region11: #{sdcem_forward.3} parent=0 // pred_check_branch
    %14 = sbr.rel (0) target = $region13
  $region12: #{sdcem_forward.3} parent=0 // pred_region
    _
  $region13: #{sdcem_forward.3} parent=0 // pred_fallthru
    _
  // Predicated region
  $region14: #{sdcem_forward.3} parent=0 // pred_check
    _
  $region15: #{sdcem_forward.3} parent=0 // pred_check_branch
    %16 = sbr.rel (0) target = $region17
  $region16: #{sdcem_forward.3} parent=0 // pred_region
    _
  $region17: #{sdcem_forward.3} parent=0 // pred_fallthru
    _
  %v18 = vld [vmem:[%s0] sm:$0xf]
  %v19 = vld [vmem:[%s0 + $0x4] sm:$0xf]
  %v20 = vld [vmem:[%s1] sm:$0xf]
  %v21 = vld [vmem:[%s1 + $0x4] sm:$0xf]
  %v22 = vld [vmem:[%s1 + $0x8] sm:$0xf]
  %v23 = vld [vmem:[%s1 + $0xc] sm:$0xf]
  %v24 = vld [vmem:[%s2] sm:$0x1]
  %v26 = vlaneseq
  %v27 = vshrl.u32 %v26, 7
  %v28 = vsub.s32 0, %v27
  %v29 = vrot.slane %v24, %v28
  %v33 = vunpack.c.l.b16 %v18
  %v34 = vunpack.c.l.b16 %v19
  %v35 = vpack.c.b16 %v34, %v33
  %v40 = vunpack.c.l.b16 %v20
  %v41 = vunpack.c.l.b16 %v21
  %v42 = vunpack.c.l.b16 %v22
  %v43 = vunpack.c.l.b16 %v23
  %v44 = vpack.c.b16 %v41, %v40
  %v45 = vpack.c.b16 %v43, %v42
  %vm48 = vcmask 261120
  %v50 = vsel %vm48, %v35, 0
  %52 = vmatprep.subr.bf16.mxu0 0
  %53 = vmatpush1.bf16.msra.mxu0 %v44
  %54 = vmatprep.subr.bf16.mxu0 0
  %55 = vmatpush1.bf16.msra.mxu0 %v45
  %56 = vmatprep.subr.bf16.mxu0 0
  %57 = vmatpush1.bf16.msra.mxu0 0
  %58 = vmatprep.subr.bf16.mxu0 0
  %59 = vmatpush1.bf16.msra.mxu0 0
  %60 = vmatprep.subr.bf16.mxu0 0
  %61 = vmatpush1.bf16.msra.mxu0 0
  %62 = vmatprep.subr.bf16.mxu0 0
  %63 = vmatpush1.bf16.msra.mxu0 0
  %64 = vmatprep.subr.bf16.mxu0 0
  %65 = vmatpush1.bf16.msra.mxu0 0
  %66 = vmatprep.subr.bf16.mxu0 0
  %67 = vmatpush1.bf16.msra.mxu0 0
  %68 = vmatprep.subr.bf16.mxu0 0
  %69 = vmatpush1.bf16.msra.mxu0 0
  %70 = vmatprep.subr.bf16.mxu0 0
  %71 = vmatpush1.bf16.msra.mxu0 0
  %72 = vmatprep.subr.bf16.mxu0 0
  %73 = vmatpush1.bf16.msra.mxu0 0
  %74 = vmatprep.subr.bf16.mxu0 0
  %75 = vmatpush1.bf16.msra.mxu0 0
  %76 = vmatprep.subr.bf16.mxu0 0
  %77 = vmatpush1.bf16.msra.mxu0 0
  %78 = vmatprep.subr.bf16.mxu0 0
  %79 = vmatpush1.bf16.msra.mxu0 0
  %80 = vmatprep.subr.bf16.mxu0 0
  %81 = vmatpush1.bf16.msra.mxu0 0
  %82 = vmatprep.subr.bf16.mxu0 0
  %83 = vmatpush1.bf16.msra.mxu0 0
  %84 = vmatprep.mubr.bf16.mxu0 0
  %85 = vmatmul.mubr.bf16.gmra.mrb[0].mxu0 %v50
  %v86 = vpop.f32.mrb[0].mxu0
  %v87 = vadd.f32 %v29, %v86
  %v88 = vpop.f32.mrb[0].mxu0
  %v89 = vpop.f32.mrb[0].mxu0
  %v90 = vadd.f32 %v29, %v89
  %v91 = vpop.f32.mrb[0].mxu0
  %92 = vdwg.mxu0
  %93 = vmax.xlane.f32.xlu0 %v87
  %v94 = vpop.xlane.xlu0 %93
  %95 = vmax.xlane.f32.xlu0 %v90
  %v96 = vpop.xlane.xlu0 %95
  %v97 = vsub.f32 %v87, %v94
  %v98 = vsub.f32 %v90, %v96
  %v99 = vmul.f32 %v97, 1.442695
  %v100 = vpow.pop %v99
  %v101 = vmul.f32 %v98, 1.442695
  %v102 = vpow.pop %v101
  %103 = vadd.xlane.f32.xlu0 %v100
  %v104 = vpop.xlane.xlu0 %103
  %105 = vadd.xlane.f32.xlu0 %v102
  %v106 = vpop.xlane.xlu0 %105
  %v107 = vlog2.pop %v104
  %v108 = vmul.f32 %v107, 0.6931472
  %v109 = vlog2.pop %v106
  %v110 = vmul.f32 %v109, 0.6931472
  %v111 = vsub.f32 %v97, %v108
  %v112 = vsub.f32 %v98, %v110
  %v113 = vld [vmem:[%s3] sm:$0xf]
  %v114 = vld [vmem:[%s3 + $0x4] sm:$0xf]
  %v115 = vunpack.c.l.bf16 %v113
  %v116 = vunpack.c.l.bf16 %v114
  %v117 = vmul.f32 %v115, %v111
  %v118 = vmul.f32 %v116, %v112
  %119 = vst [vmem:[%s4] sm:$0xff] %v117
  %120 = vst [vmem:[%s4 + $0x8] sm:$0xff] %v118
  // Predicated region
  $region18: #{sdcem_forward.3} parent=0 // pred_check
    _
  $region19: #{sdcem_forward.3} parent=0 // pred_check_branch
    %122 = sbr.rel (0) target = $region21
  $region20: #{sdcem_forward.3} parent=0 // pred_region
    _
  $region21: #{sdcem_forward.3} parent=0 // pred_fallthru
    _
  // Predicated region
  $region22: #{sdcem_forward.3} parent=0 // pred_check
    _
  $region23: #{sdcem_forward.3} parent=0 // pred_check_branch
    %124 = sbr.rel (0) target = $region25
  $region24: #{sdcem_forward.3} parent=0 // pred_region
    _
  $region25: #{sdcem_forward.3} parent=0 // pred_fallthru
    _

</llo_original>
